<compile_context>
chip_gen: v7x
topology: tpu7x:2x2x1
jax: 0.10.0
libtpu: 0.0.40
codegen_flags: <defaults>
</compile_context>

<pallas_src>
import functools

import jax
import jax.numpy as jnp
from jax.experimental import pallas as pl
from jax.experimental.pallas import tpu as pltpu

K = 7  # CausalConv1d kernel size from the module


def residual_unit_kernel(x_ref, w1_ref, b1_ref, w2_ref, b2_ref, out_ref,
                         xe_ref, *, dilation, tT, pad_al):
    """One (batch, time-tile) grid step.  (B, C, T) layout, time on lanes.

    x_ref:   (1, C, tT)        input tile (conv input AND residual)
    w1_ref:  (K, O, C)         dilated-conv weight; w1_ref[k] = tap-k (O, C) matrix
    b1_ref:  (O, 1)
    w2_ref:  (O, C)            1x1-conv weight
    b2_ref:  (O, 1)
    out_ref: (1, O, tT)
    xe_ref:  (C, pad_al + tT)  persistent VMEM scratch: columns [0, pad_al) hold
             the causal history carried across time tiles, [pad_al, ...) the tile.
    """
    C = x_ref.shape[1]
    t = pl.program_id(1)

    @pl.when(t == 0)
    def _():                                       # start of a batch element
        xe_ref[:, :pad_al] = jnp.zeros((C, pad_al), xe_ref.dtype)

    @pl.when(t > 0)
    def _():                                       # carry causal history forward
        xe_ref[:, :pad_al] = xe_ref[:, tT:tT + pad_al]

    x = x_ref[0]                                   # (C, tT)
    xe_ref[:, pad_al:pad_al + tT] = x              # lane-aligned store

    # Dilated causal conv: 7 weight-stationary matmuls accumulated in f32.
    acc = jnp.zeros((out_ref.shape[1], tT), jnp.float32)
    for k in range(K):
        off = pad_al - (K - 1 - k) * dilation      # static lane offset
        acc = acc + jnp.dot(w1_ref[k], xe_ref[:, off:off + tT],
                            preferred_element_type=jnp.float32)
    h = acc + b1_ref[...]

    # ELU (alpha = 1); exp(min(h, 0)) keeps the unused branch from overflowing.
    # TODO(synk): switch to jnp.expm1 once it is confirmed in the Mosaic lowering set.
    h = jnp.where(h > 0, h, jnp.exp(jnp.minimum(h, 0.0)) - 1.0)

    # 1x1 conv == plain matmul over channels.
    y = jnp.dot(w2_ref[...], h, preferred_element_type=jnp.float32) + b2_ref[...]

    # Residual add (residual read from the same x tile -- single HBM read of x).
    out_ref[0] = (x.astype(jnp.float32) + y).astype(out_ref.dtype)


def _round_up(x, m):
    return ((x + m - 1) // m) * m


def _pick_time_tile(T, pad, target):
    """Time tile (multiple of 128, >= lane-aligned causal pad) and aligned pad."""
    pad_al = _round_up(max(pad, 1), 128)           # history region, lane-aligned
    tT = _round_up(max(target, pad_al), 128)
    if tT >= T:
        return T, pad_al                           # single tile (block == full dims)
    return tT, pad_al


def residual_unit(x_nct, w1, b1, w2, b2, dilation, *, time_tile=1024):
    """x_nct: (B, C, T) like PyTorch Conv1d input. Returns (B, C, T)."""
    B, C, T = x_nct.shape
    O = w1.shape[0]
    assert O == C, "residual add requires out_channels == in_channels"
    pad = dilation * (K - 1)

    tT, pad_al = _pick_time_tile(T, pad, time_tile)
    nT = pl.cdiv(T, tT)

    # Weight/bias repacking (tiny; once per call).
    w1_koc = jnp.transpose(w1, (2, 0, 1))          # (K, O, C); [k] = tap-k matrix
    w2_oc = w2[:, :, 0]                            # (O, C)
    b1_2d = b1.reshape(O, 1)
    b2_2d = b2.reshape(O, 1)

    # TODO(synk): for wide C/O add an output-channel grid axis and mark the weight
    # BlockSpecs pipeline_mode=pl.Buffered(1); optionally feed bf16 activations /
    # weights (f32 accumulation) for v6e/v7x MXU rates and halved HBM traffic.

    esz = jnp.dtype(x_nct.dtype).itemsize
    vmem_needed = (2 * C * tT * esz + 2 * O * tT * esz          # x/out double buffers
                   + 2 * (K * O * C + O * C + 2 * O) * 4        # resident weights
                   + C * (pad_al + tT) * esz)                   # carried scratch
    vmem_limit = int(min(max(4 * vmem_needed, 32 << 20), 64 << 20))

    kernel = functools.partial(residual_unit_kernel, dilation=dilation,
                               tT=tT, pad_al=pad_al)

    flops = 2.0 * B * T * C * O * (K + 1) + 8.0 * B * T * O
    cost = pl.CostEstimate(
        flops=int(flops),
        transcendentals=int(B * T * O),
        bytes_accessed=int(esz * (B * T * C + B * T * O)
                           + 4 * (K * O * C + O * C + 2 * O)))

    return pl.pallas_call(
        kernel,
        out_shape=jax.ShapeDtypeStruct((B, O, T), x_nct.dtype),
        grid=(B, nT),
        in_specs=[
            pl.BlockSpec((1, C, tT), lambda b, t: (b, 0, t)),    # x tile
            pl.BlockSpec((K, O, C), lambda b, t: (0, 0, 0)),     # w1 (resident)
            pl.BlockSpec((O, 1), lambda b, t: (0, 0)),           # b1
            pl.BlockSpec((O, C), lambda b, t: (0, 0)),           # w2
            pl.BlockSpec((O, 1), lambda b, t: (0, 0)),           # b2
        ],
        out_specs=pl.BlockSpec((1, O, tT), lambda b, t: (b, 0, t)),
        scratch_shapes=[pltpu.VMEM((C, pad_al + tT), x_nct.dtype)],
        compiler_params=pltpu.CompilerParams(
            dimension_semantics=("parallel", "arbitrary"),
            vmem_limit_bytes=vmem_limit),
        cost_estimate=cost,
    )(x_nct, w1_koc, b1_2d, w2_oc, b2_2d)


def reference_forward(x_nct, w1, b1, w2, b2, dilation):
    """Pure-JAX mirror of the PyTorch module for verification."""
    pad = dilation * (K - 1)
    xpad = jnp.pad(x_nct, ((0, 0), (0, 0), (pad, 0)))
    y = jax.lax.conv_general_dilated(
        xpad, w1, window_strides=(1,), padding="VALID",
        rhs_dilation=(dilation,), dimension_numbers=("NCH", "OIH", "NCH"),
        precision=jax.lax.Precision.HIGHEST)
    y = y + b1[None, :, None]
    y = jnp.where(y > 0, y, jnp.exp(jnp.minimum(y, 0.0)) - 1.0)   # ELU
    z = jax.lax.conv_general_dilated(
        y, w2, window_strides=(1,), padding="VALID",
        dimension_numbers=("NCH", "OIH", "NCH"),
        precision=jax.lax.Precision.HIGHEST)
    z = z + b2[None, :, None]
    return x_nct + z


if __name__ == "__main__":
    key = jax.random.PRNGKey(0)
    kw1, kb1, kw2, kb2, kx1, kx2 = jax.random.split(key, 6)

    B, C = 2, 8
    O = C  # residual add requires out_channels == in_channels

    # Deterministic synthetic parameters (shapes match nn.Conv1d's weights).
    w1 = 0.1 * jax.random.normal(kw1, (O, C, K), dtype=jnp.float32)   # causal conv
    b1 = 0.1 * jax.random.normal(kb1, (O,), dtype=jnp.float32)
    w2 = 0.1 * jax.random.normal(kw2, (O, C, 1), dtype=jnp.float32)   # 1x1 conv
    b2 = 0.1 * jax.random.normal(kb2, (O,), dtype=jnp.float32)

    # Case 1: short sequence -> single time tile per batch element.
    d1, T1 = 2, 16
    x1 = jax.random.normal(kx1, (B, C, T1), dtype=jnp.float32)
    out1 = jax.block_until_ready(residual_unit(x1, w1, b1, w2, b2, d1))
    ref1 = reference_forward(x1, w1, b1, w2, b2, d1)
    assert out1.shape == (B, C, T1)
    assert jnp.allclose(out1, ref1, atol=1e-3, rtol=1e-3), "mismatch (single tile)"

    # Case 2: longer, non-divisible sequence with a forced 128-wide time tile
    # -> exercises the cdiv grid, the partial last tile and the carried halo.
    d2, T2 = 3, 400
    x2 = jax.random.normal(kx2, (B, C, T2), dtype=jnp.float32)
    out2 = jax.block_until_ready(
        residual_unit(x2, w1, b1, w2, b2, d2, time_tile=128))
    ref2 = reference_forward(x2, w1, b1, w2, b2, d2)
    assert out2.shape == (B, C, T2)
    assert jnp.allclose(out2, ref2, atol=1e-3, rtol=1e-3), "mismatch (tiled)"

    print("KERNEL_OK")
</pallas_src>

<mosaic_0001>
module attributes {stable_mosaic.version = 11 : i64} {
  func.func @residual_unit_kernel(%arg0: i32, %arg1: i32, %arg2: memref<1x8x16xf32, #tpu.memory_space<vmem>>, %arg3: memref<7x8x8xf32, #tpu.memory_space<vmem>>, %arg4: memref<8x1xf32, #tpu.memory_space<vmem>>, %arg5: memref<8x8xf32, #tpu.memory_space<vmem>>, %arg6: memref<8x1xf32, #tpu.memory_space<vmem>>, %arg7: memref<1x8x16xf32, #tpu.memory_space<vmem>>, %arg8: memref<8x144xf32, #tpu.memory_space<vmem>>) attributes {dimension_semantics = [#tpu.dimension_semantics<parallel>, #tpu.dimension_semantics<arbitrary>], iteration_bounds = array<i64: 2, 1>, scalar_prefetch = 0 : i64, scratch_operands = 1 : i64, tpu.core_type = #tpu.core_type<tc>, window_params = [{transform_indices = @transform_0, window_bounds = array<i64: 1, 8, 16>}, {pipeline_mode = #tpu.pipeline_mode<synchronous>, transform_indices = @transform_1, window_bounds = array<i64: 7, 8, 8>}, {pipeline_mode = #tpu.pipeline_mode<synchronous>, transform_indices = @transform_2, window_bounds = array<i64: 8, 1>}, {pipeline_mode = #tpu.pipeline_mode<synchronous>, transform_indices = @transform_3, window_bounds = array<i64: 8, 8>}, {pipeline_mode = #tpu.pipeline_mode<synchronous>, transform_indices = @transform_4, window_bounds = array<i64: 8, 1>}, {transform_indices = @transform_5, window_bounds = array<i64: 1, 8, 16>}]} {
    %c0_i32 = arith.constant 0 : i32
    %0 = arith.cmpi eq, %arg1, %c0_i32 : i32
    %1 = arith.extui %0 : i1 to i32
    %c0_i32_0 = arith.constant 0 : i32
    %2 = arith.cmpi ne, %1, %c0_i32_0 : i32
    scf.if %2 {
      %cst_49 = arith.constant 0.000000e+00 : f32
      %65 = vector.broadcast %cst_49 : f32 to vector<8x128xf32>
      %c0_50 = arith.constant 0 : index
      %c0_51 = arith.constant 0 : index
      %66 = vector.load %arg8[%c0_50, %c0_51] : memref<8x144xf32, #tpu.memory_space<vmem>>, vector<8x128xf32>
      tpu.vector_store %arg8[%c0_50, %c0_51], %65 {strides = array<i32>} : memref<8x144xf32, #tpu.memory_space<vmem>>, vector<8x128xf32>,
    } else {
    }
    %c0_i32_1 = arith.constant 0 : i32
    %3 = arith.cmpi sgt, %arg1, %c0_i32_1 : i32
    %4 = arith.extui %3 : i1 to i32
    %c0_i32_2 = arith.constant 0 : i32
    %5 = arith.cmpi ne, %4, %c0_i32_2 : i32
    scf.if %5 {
      %c0_49 = arith.constant 0 : index
      %c16 = arith.constant 16 : index
      %65 = vector.load %arg8[%c0_49, %c16] : memref<8x144xf32, #tpu.memory_space<vmem>>, vector<8x128xf32>
      %c0_50 = arith.constant 0 : index
      %c0_51 = arith.constant 0 : index
      %66 = vector.load %arg8[%c0_50, %c0_51] : memref<8x144xf32, #tpu.memory_space<vmem>>, vector<8x128xf32>
      tpu.vector_store %arg8[%c0_50, %c0_51], %65 {strides = array<i32>} : memref<8x144xf32, #tpu.memory_space<vmem>>, vector<8x128xf32>,
    } else {
    }
    %c0 = arith.constant 0 : index
    %c0_3 = arith.constant 0 : index
    %c0_4 = arith.constant 0 : index
    %6 = vector.load %arg2[%c0, %c0_3, %c0_4] : memref<1x8x16xf32, #tpu.memory_space<vmem>>, vector<1x8x16xf32>
    %7 = vector.shape_cast %6 : vector<1x8x16xf32> to vector<8x16xf32>
    %c0_5 = arith.constant 0 : index
    %c128 = arith.constant 128 : index
    %8 = vector.load %arg8[%c0_5, %c128] : memref<8x144xf32, #tpu.memory_space<vmem>>, vector<8x16xf32>
    tpu.vector_store %arg8[%c0_5, %c128], %7 {strides = array<i32>} : memref<8x144xf32, #tpu.memory_space<vmem>>, vector<8x16xf32>,
    %cst = arith.constant 0.000000e+00 : f32
    %9 = vector.broadcast %cst : f32 to vector<8x16xf32>
    %c0_6 = arith.constant 0 : index
    %c0_7 = arith.constant 0 : index
    %c0_8 = arith.constant 0 : index
    %10 = vector.load %arg3[%c0_6, %c0_7, %c0_8] : memref<7x8x8xf32, #tpu.memory_space<vmem>>, vector<1x8x8xf32>
    %11 = vector.shape_cast %10 : vector<1x8x8xf32> to vector<8x8xf32>
    %c0_9 = arith.constant 0 : index
    %c116 = arith.constant 116 : index
    %12 = vector.load %arg8[%c0_9, %c116] : memref<8x144xf32, #tpu.memory_space<vmem>>, vector<8x16xf32>
    %cst_10 = arith.constant dense<0.000000e+00> : vector<8x16xf32>
    %13 = tpu.matmul %11, %12, %cst_10 {dimension_numbers = #tpu.dot_dimension_numbers<[1], [0], [0], [1], [0, 0, 1, 1], [], []>} : vector<8x8xf32>, vector<8x16xf32>, vector<8x16xf32> -> vector<8x16xf32>
    %14 = arith.addf %9, %13 : vector<8x16xf32>
    %c1 = arith.constant 1 : index
    %c0_11 = arith.constant 0 : index
    %c0_12 = arith.constant 0 : index
    %15 = vector.load %arg3[%c1, %c0_11, %c0_12] : memref<7x8x8xf32, #tpu.memory_space<vmem>>, vector<1x8x8xf32>
    %16 = vector.shape_cast %15 : vector<1x8x8xf32> to vector<8x8xf32>
    %c0_13 = arith.constant 0 : index
    %c118 = arith.constant 118 : index
    %17 = vector.load %arg8[%c0_13, %c118] : memref<8x144xf32, #tpu.memory_space<vmem>>, vector<8x16xf32>
    %cst_14 = arith.constant dense<0.000000e+00> : vector<8x16xf32>
    %18 = tpu.matmul %16, %17, %cst_14 {dimension_numbers = #tpu.dot_dimension_numbers<[1], [0], [0], [1], [0, 0, 1, 1], [], []>} : vector<8x8xf32>, vector<8x16xf32>, vector<8x16xf32> -> vector<8x16xf32>
    %19 = arith.addf %14, %18 : vector<8x16xf32>
    %c2 = arith.constant 2 : index
    %c0_15 = arith.constant 0 : index
    %c0_16 = arith.constant 0 : index
    %20 = vector.load %arg3[%c2, %c0_15, %c0_16] : memref<7x8x8xf32, #tpu.memory_space<vmem>>, vector<1x8x8xf32>
    %21 = vector.shape_cast %20 : vector<1x8x8xf32> to vector<8x8xf32>
    %c0_17 = arith.constant 0 : index
    %c120 = arith.constant 120 : index
    %22 = vector.load %arg8[%c0_17, %c120] : memref<8x144xf32, #tpu.memory_space<vmem>>, vector<8x16xf32>
    %cst_18 = arith.constant dense<0.000000e+00> : vector<8x16xf32>
    %23 = tpu.matmul %21, %22, %cst_18 {dimension_numbers = #tpu.dot_dimension_numbers<[1], [0], [0], [1], [0, 0, 1, 1], [], []>} : vector<8x8xf32>, vector<8x16xf32>, vector<8x16xf32> -> vector<8x16xf32>
    %24 = arith.addf %19, %23 : vector<8x16xf32>
    %c3 = arith.constant 3 : index
    %c0_19 = arith.constant 0 : index
    %c0_20 = arith.constant 0 : index
    %25 = vector.load %arg3[%c3, %c0_19, %c0_20] : memref<7x8x8xf32, #tpu.memory_space<vmem>>, vector<1x8x8xf32>
    %26 = vector.shape_cast %25 : vector<1x8x8xf32> to vector<8x8xf32>
    %c0_21 = arith.constant 0 : index
    %c122 = arith.constant 122 : index
    %27 = vector.load %arg8[%c0_21, %c122] : memref<8x144xf32, #tpu.memory_space<vmem>>, vector<8x16xf32>
    %cst_22 = arith.constant dense<0.000000e+00> : vector<8x16xf32>
    %28 = tpu.matmul %26, %27, %cst_22 {dimension_numbers = #tpu.dot_dimension_numbers<[1], [0], [0], [1], [0, 0, 1, 1], [], []>} : vector<8x8xf32>, vector<8x16xf32>, vector<8x16xf32> -> vector<8x16xf32>
    %29 = arith.addf %24, %28 : vector<8x16xf32>
    %c4 = arith.constant 4 : index
    %c0_23 = arith.constant 0 : index
    %c0_24 = arith.constant 0 : index
    %30 = vector.load %arg3[%c4, %c0_23, %c0_24] : memref<7x8x8xf32, #tpu.memory_space<vmem>>, vector<1x8x8xf32>
    %31 = vector.shape_cast %30 : vector<1x8x8xf32> to vector<8x8xf32>
    %c0_25 = arith.constant 0 : index
    %c124 = arith.constant 124 : index
    %32 = vector.load %arg8[%c0_25, %c124] : memref<8x144xf32, #tpu.memory_space<vmem>>, vector<8x16xf32>
    %cst_26 = arith.constant dense<0.000000e+00> : vector<8x16xf32>
    %33 = tpu.matmul %31, %32, %cst_26 {dimension_numbers = #tpu.dot_dimension_numbers<[1], [0], [0], [1], [0, 0, 1, 1], [], []>} : vector<8x8xf32>, vector<8x16xf32>, vector<8x16xf32> -> vector<8x16xf32>
    %34 = arith.addf %29, %33 : vector<8x16xf32>
    %c5 = arith.constant 5 : index
    %c0_27 = arith.constant 0 : index
    %c0_28 = arith.constant 0 : index
    %35 = vector.load %arg3[%c5, %c0_27, %c0_28] : memref<7x8x8xf32, #tpu.memory_space<vmem>>, vector<1x8x8xf32>
    %36 = vector.shape_cast %35 : vector<1x8x8xf32> to vector<8x8xf32>
    %c0_29 = arith.constant 0 : index
    %c126 = arith.constant 126 : index
    %37 = vector.load %arg8[%c0_29, %c126] : memref<8x144xf32, #tpu.memory_space<vmem>>, vector<8x16xf32>
    %cst_30 = arith.constant dense<0.000000e+00> : vector<8x16xf32>
    %38 = tpu.matmul %36, %37, %cst_30 {dimension_numbers = #tpu.dot_dimension_numbers<[1], [0], [0], [1], [0, 0, 1, 1], [], []>} : vector<8x8xf32>, vector<8x16xf32>, vector<8x16xf32> -> vector<8x16xf32>
    %39 = arith.addf %34, %38 : vector<8x16xf32>
    %c6 = arith.constant 6 : index
    %c0_31 = arith.constant 0 : index
    %c0_32 = arith.constant 0 : index
    %40 = vector.load %arg3[%c6, %c0_31, %c0_32] : memref<7x8x8xf32, #tpu.memory_space<vmem>>, vector<1x8x8xf32>
    %41 = vector.shape_cast %40 : vector<1x8x8xf32> to vector<8x8xf32>
    %c0_33 = arith.constant 0 : index
    %c128_34 = arith.constant 128 : index
    %42 = vector.load %arg8[%c0_33, %c128_34] : memref<8x144xf32, #tpu.memory_space<vmem>>, vector<8x16xf32>
    %cst_35 = arith.constant dense<0.000000e+00> : vector<8x16xf32>
    %43 = tpu.matmul %41, %42, %cst_35 {dimension_numbers = #tpu.dot_dimension_numbers<[1], [0], [0], [1], [0, 0, 1, 1], [], []>} : vector<8x8xf32>, vector<8x16xf32>, vector<8x16xf32> -> vector<8x16xf32>
    %44 = arith.addf %39, %43 : vector<8x16xf32>
    %c0_36 = arith.constant 0 : index
    %c0_37 = arith.constant 0 : index
    %45 = vector.load %arg4[%c0_36, %c0_37] : memref<8x1xf32, #tpu.memory_space<vmem>>, vector<8x1xf32>
    %46 = vector.broadcast %45 : vector<8x1xf32> to vector<8x16xf32>
    %47 = arith.addf %44, %46 : vector<8x16xf32>
    %cst_38 = arith.constant 0.000000e+00 : f32
    %48 = vector.broadcast %cst_38 : f32 to vector<8x16xf32>
    %49 = arith.cmpf ogt, %47, %48 : vector<8x16xf32>
    %cst_39 = arith.constant 0.000000e+00 : f32
    %50 = vector.broadcast %cst_39 : f32 to vector<8x16xf32>
    %51 = arith.minimumf %47, %50 : vector<8x16xf32>
    %52 = math.exp %51 : vector<8x16xf32>
    %cst_40 = arith.constant 1.000000e+00 : f32
    %53 = vector.broadcast %cst_40 : f32 to vector<8x16xf32>
    %54 = arith.subf %52, %53 : vector<8x16xf32>
    %55 = arith.select %49, %47, %54 : vector<8x16xi1>, vector<8x16xf32>
    %c0_41 = arith.constant 0 : index
    %c0_42 = arith.constant 0 : index
    %56 = vector.load %arg5[%c0_41, %c0_42] : memref<8x8xf32, #tpu.memory_space<vmem>>, vector<8x8xf32>
    %cst_43 = arith.constant dense<0.000000e+00> : vector<8x16xf32>
    %57 = tpu.matmul %56, %55, %cst_43 {dimension_numbers = #tpu.dot_dimension_numbers<[1], [0], [0], [1], [0, 0, 1, 1], [], []>} : vector<8x8xf32>, vector<8x16xf32>, vector<8x16xf32> -> vector<8x16xf32>
    %c0_44 = arith.constant 0 : index
    %c0_45 = arith.constant 0 : index
    %58 = vector.load %arg6[%c0_44, %c0_45] : memref<8x1xf32, #tpu.memory_space<vmem>>, vector<8x1xf32>
    %59 = vector.broadcast %58 : vector<8x1xf32> to vector<8x16xf32>
    %60 = arith.addf %57, %59 : vector<8x16xf32>
    %61 = arith.addf %7, %60 : vector<8x16xf32>
    %c0_46 = arith.constant 0 : index
    %c0_47 = arith.constant 0 : index
    %c0_48 = arith.constant 0 : index
    %62 = vector.load %arg7[%c0_46, %c0_47, %c0_48] : memref<1x8x16xf32, #tpu.memory_space<vmem>>, vector<1x8x16xf32>
    %63 = vector.shape_cast %62 : vector<1x8x16xf32> to vector<8x16xf32>
    %64 = vector.shape_cast %61 : vector<8x16xf32> to vector<1x8x16xf32>
    tpu.vector_store %arg7[%c0_46, %c0_47, %c0_48], %64 {strides = array<i32>} : memref<1x8x16xf32, #tpu.memory_space<vmem>>, vector<1x8x16xf32>,
    return
  }
  func.func @transform_0(%arg0: i32, %arg1: i32) -> (i32, i32, i32) {
    %c0_i32 = arith.constant 0 : i32
    %c0_i32_0 = arith.constant 0 : i32
    return %arg0, %c0_i32, %arg1 : i32, i32, i32
  }
  func.func @transform_1(%arg0: i32, %arg1: i32) -> (i32, i32, i32) {
    %c0_i32 = arith.constant 0 : i32
    %c0_i32_0 = arith.constant 0 : i32
    %c0_i32_1 = arith.constant 0 : i32
    %c0_i32_2 = arith.constant 0 : i32
    return %c0_i32, %c0_i32_0, %c0_i32_1 : i32, i32, i32
  }
  func.func @transform_2(%arg0: i32, %arg1: i32) -> (i32, i32) {
    %c0_i32 = arith.constant 0 : i32
    %c0_i32_0 = arith.constant 0 : i32
    %c0_i32_1 = arith.constant 0 : i32
    return %c0_i32, %c0_i32_0 : i32, i32
  }
  func.func @transform_3(%arg0: i32, %arg1: i32) -> (i32, i32) {
    %c0_i32 = arith.constant 0 : i32
    %c0_i32_0 = arith.constant 0 : i32
    %c0_i32_1 = arith.constant 0 : i32
    return %c0_i32, %c0_i32_0 : i32, i32
  }
  func.func @transform_4(%arg0: i32, %arg1: i32) -> (i32, i32) {
    %c0_i32 = arith.constant 0 : i32
    %c0_i32_0 = arith.constant 0 : i32
    %c0_i32_1 = arith.constant 0 : i32
    return %c0_i32, %c0_i32_0 : i32, i32
  }
  func.func @transform_5(%arg0: i32, %arg1: i32) -> (i32, i32, i32) {
    %c0_i32 = arith.constant 0 : i32
    %c0_i32_0 = arith.constant 0 : i32
    return %arg0, %c0_i32, %arg1 : i32, i32, i32
  }
}

</mosaic_0001>

<llo_original>
// kernel: tpu_custom_call.1
$region0: #{tpu_custom_call.1}
  #allocation0 [shape = 'u32[]', space=smem, size = 0x4, offset = 0x4, fixed_abs, tag = 'smem constant byte address 0x4 - core index']
  #allocation1 [shape = 'u32[144,128]{1,0:T(1,128)}', space=vmem, size = 0x12000, scoped, tag = 'internal scratch']
  #allocation2 [shape = 'f32[8,144]{1,0:T(8,128)}', space=vmem, size = 0x2000, scoped, tag = 'scratch operand']
  %s0 = inlined_call_operand.vmem [shape: f32[2,8,16], index: 0, kind: input, shape index: {}]
  %s1 = inlined_call_operand.hbm [shape: f32[7,8,8], index: 1, kind: input, shape index: {}]
  %s2 = inlined_call_operand.vmem [shape: f32[8,1], index: 2, kind: input, shape index: {}]
  %s3 = inlined_call_operand.vmem [shape: f32[8,8], index: 3, kind: input, shape index: {}]
  %s4 = inlined_call_operand.vmem [shape: f32[8,1], index: 4, kind: input, shape index: {}]
  %s5 = inlined_call_operand.hbm [shape: f32[2,8,16], index: 5, kind: output, shape index: {}]
  %s6 = sld [smem:[#allocation0]]
  $region65: #{tpu_custom_call.1} parent=0
    _
  %s8 = ssub.s32 1, %s6
  %s9 = scalar_select 0, %s8, %s6
  $region1: #{tpu_custom_call.1} parent=0
    #allocation3 [shape = 'u8[28672]{0}', space=vmem, size = 0x7000, scoped, tag = 'input window, operand 1, single buffered']
    #allocation4 [shape = 's32[2]{0}', space=sflag, size = 0x8, scoped, tag = 'scoped memory for tpu_custom_call.1']
    #allocation5 [shape = 's32[2]{0}', space=sflag, size = 0x8, scoped, tag = 'scoped memory for tpu_custom_call.1']
    #allocation6 [shape = 'u8[8192]{0}', space=vmem, size = 0x2000, scoped, tag = 'output window, operand 0']
    %10 = vsyncpa [#allocation4], 0
    %11 = vsyncpa [#allocation5], 0
    %s12 = scalar_lea.sflag [#allocation5], 1
    %13 = vsyncpa %s12, 0
    loop: start=0, step=1, limit=4
    $region2: #{tpu_custom_call.1} parent=1 // loop_pre_header
      _
    $region3: #{tpu_custom_call.1} parent=1 // loop_header
      %s15 = sphi 0, %s19
      %p16 = scmp.ge.s32.totalorder %s15, 4
      %s22 = sphi 0, %s34
      %s23 = sphi 0, %s30
      %s24 = sphi 0, %s22
      %s25 = sphi 0, %s23
      %s26 = sphi 0, %s24
      %s27 = sphi 0, %s25
      %s39 = sphi 0, %s41
      %s42 = sphi 0, %s39
      %s43 = sphi 0, %s42
      %s59 = sphi 0, %s43
      %s63 = sphi 0, %s63
      %s65 = sphi 0, %s63
      %s66 = sphi 0, %s65
      %s80 = sphi 0, %s66
      %s84 = sphi 0, %s84
      %s86 = sphi 0, %s84
      %s87 = sphi 0, %s86
      %s101 = sphi 0, %s87
      %s105 = sphi 0, %s105
      %s107 = sphi 0, %s105
      %s108 = sphi 0, %s107
      %s122 = sphi 0, %s108
      %s126 = sphi 0, %s126
      %s128 = sphi 0, %s126
      %s129 = sphi 0, %s128
      %s143 = sphi 0, %s129
      %s151 = sphi 0, %s153
      %s154 = sphi 0, %s151
      %s155 = sphi 0, %s154
      %s171 = sphi 0, %s155
    $region4: #{tpu_custom_call.1} parent=1 // loop_header_branch
      %18 = sbr.rel (%p16) target = $region8
    $region5: #{tpu_custom_call.1} parent=1 // loop_body
      %s20 = ssub.s32 %s15, 1
      %s21 = ssub.s32 %s15, 2
      %s28 = sadd.s32 1, %s23
      %p29 = scmp.ge.s32.totalorder %s28, 1
      %s30 = scalar_select %p29, 0, %s28
      %s31 = sadd.s32 1, %s22
      %s32 = scalar_select %p29, %s31, %s22
      %p33 = scmp.ge.s32.totalorder %s32, 2
      %s34 = scalar_select %p33, 0, %s32
      %s35 = ssub.s32 %s22, %s34
      %s36 = ssub.s32 %s23, %s30
      %s37 = sor.u32 %s35, %s36
      %p38 = scmp.eq.s32.totalorder %s37, 0
      %s40 = sadd.s32 %s39, 1
      %s41 = scalar_select %p38, %s39, %s40
      %p44 = pneg %p38
      %p45 = scmp.eq.s32.totalorder %s15, 1
      %p46 = por %p44, %p45
      %p47 = scmp.ne.s32.totalorder %s39, %s42
      %p48 = scmp.eq.s32.totalorder %s15, 0
      %p49 = por %p47, %p48
      %p50 = scmp.ne.s32.totalorder %s39, %s42
      %p51 = scmp.eq.s32.totalorder %s20, 1
      %p52 = por %p50, %p51
      %p53 = scmp.ne.s32.totalorder %s42, %s43
      %p54 = scmp.eq.s32.totalorder %s20, 0
      %p55 = por %p53, %p54
      %p56 = scmp.ne.s32.totalorder %s42, %s43
      %p57 = scmp.eq.s32.totalorder %s21, 1
      %p58 = por %p56, %p57
      %p60 = scmp.ne.s32.totalorder %s43, %s59
      %p61 = scmp.eq.s32.totalorder %s21, 0
      %p62 = por %p60, %p61
      %s64 = sadd.s32 %s63, 1
      %p67 = scmp.eq.s32.totalorder %s15, 1
      %p68 = scmp.ne.s32.totalorder %s63, %s65
      %p69 = scmp.eq.s32.totalorder %s15, 0
      %p70 = por %p68, %p69
      %p71 = scmp.ne.s32.totalorder %s63, %s65
      %p72 = scmp.eq.s32.totalorder %s20, 1
      %p73 = por %p71, %p72
      %p74 = scmp.ne.s32.totalorder %s65, %s66
      %p75 = scmp.eq.s32.totalorder %s20, 0
      %p76 = por %p74, %p75
      %p77 = scmp.ne.s32.totalorder %s65, %s66
      %p78 = scmp.eq.s32.totalorder %s21, 1
      %p79 = por %p77, %p78
      %p81 = scmp.ne.s32.totalorder %s66, %s80
      %p82 = scmp.eq.s32.totalorder %s21, 0
      %p83 = por %p81, %p82
      %s85 = sadd.s32 %s84, 1
      %p88 = scmp.eq.s32.totalorder %s15, 1
      %p89 = scmp.ne.s32.totalorder %s84, %s86
      %p90 = scmp.eq.s32.totalorder %s15, 0
      %p91 = por %p89, %p90
      %p92 = scmp.ne.s32.totalorder %s84, %s86
      %p93 = scmp.eq.s32.totalorder %s20, 1
      %p94 = por %p92, %p93
      %p95 = scmp.ne.s32.totalorder %s86, %s87
      %p96 = scmp.eq.s32.totalorder %s20, 0
      %p97 = por %p95, %p96
      %p98 = scmp.ne.s32.totalorder %s86, %s87
      %p99 = scmp.eq.s32.totalorder %s21, 1
      %p100 = por %p98, %p99
      %p102 = scmp.ne.s32.totalorder %s87, %s101
      %p103 = scmp.eq.s32.totalorder %s21, 0
      %p104 = por %p102, %p103
      %s106 = sadd.s32 %s105, 1
      %p109 = scmp.eq.s32.totalorder %s15, 1
      %p110 = scmp.ne.s32.totalorder %s105, %s107
      %p111 = scmp.eq.s32.totalorder %s15, 0
      %p112 = por %p110, %p111
      %p113 = scmp.ne.s32.totalorder %s105, %s107
      %p114 = scmp.eq.s32.totalorder %s20, 1
      %p115 = por %p113, %p114
      %p116 = scmp.ne.s32.totalorder %s107, %s108
      %p117 = scmp.eq.s32.totalorder %s20, 0
      %p118 = por %p116, %p117
      %p119 = scmp.ne.s32.totalorder %s107, %s108
      %p120 = scmp.eq.s32.totalorder %s21, 1
      %p121 = por %p119, %p120
      %p123 = scmp.ne.s32.totalorder %s108, %s122
      %p124 = scmp.eq.s32.totalorder %s21, 0
      %p125 = por %p123, %p124
      %s127 = sadd.s32 %s126, 1
      %p130 = scmp.eq.s32.totalorder %s15, 1
      %p131 = scmp.ne.s32.totalorder %s126, %s128
      %p132 = scmp.eq.s32.totalorder %s15, 0
      %p133 = por %p131, %p132
      %p134 = scmp.ne.s32.totalorder %s126, %s128
      %p135 = scmp.eq.s32.totalorder %s20, 1
      %p136 = por %p134, %p135
      %p137 = scmp.ne.s32.totalorder %s128, %s129
      %p138 = scmp.eq.s32.totalorder %s20, 0
      %p139 = por %p137, %p138
      %p140 = scmp.ne.s32.totalorder %s128, %s129
      %p141 = scmp.eq.s32.totalorder %s21, 1
      %p142 = por %p140, %p141
      %p144 = scmp.ne.s32.totalorder %s129, %s143
      %p145 = scmp.eq.s32.totalorder %s21, 0
      %p146 = por %p144, %p145
      %s147 = ssub.s32 %s22, %s34
      %s148 = ssub.s32 %s23, %s30
      %s149 = sor.u32 %s147, %s148
      %p150 = scmp.eq.s32.totalorder %s149, 0
      %s152 = sadd.s32 %s151, 1
      %s153 = scalar_select %p150, %s151, %s152
      %p156 = pneg %p150
      %p157 = scmp.eq.s32.totalorder %s15, 1
      %p158 = por %p156, %p157
      %p159 = scmp.ne.s32.totalorder %s151, %s154
      %p160 = scmp.eq.s32.totalorder %s15, 0
      %p161 = por %p159, %p160
      %p162 = scmp.ne.s32.totalorder %s151, %s154
      %p163 = scmp.eq.s32.totalorder %s20, 1
      %p164 = por %p162, %p163
      %p165 = scmp.ne.s32.totalorder %s154, %s155
      %p166 = scmp.eq.s32.totalorder %s20, 0
      %p167 = por %p165, %p166
      %p168 = scmp.ne.s32.totalorder %s154, %s155
      %p169 = scmp.eq.s32.totalorder %s21, 1
      %p170 = por %p168, %p169
      %p172 = scmp.ne.s32.totalorder %s155, %s171
      %p173 = scmp.eq.s32.totalorder %s21, 0
      %p174 = por %p172, %p173
      %p175 = scmp.le.s32.totalorder 1, %s15
      %p176 = scmp.lt.s32.totalorder %s15, 3
      %p177 = pnand %p175, %p176
      %p178 = pneg %p177
      // Predicated region
      $region9: #{tpu_custom_call.1} parent=5 // pred_check
        _
      $region10: #{tpu_custom_call.1} parent=5 // pred_check_branch
        %180 = sbr.rel (%p177) target = $region12
      $region11: #{tpu_custom_call.1} parent=5 // pred_region
        %s181 = ssub.s32 %s15, 1
        // Predicated region
        $region13: #{tpu_custom_call.1} parent=11 // pred_check
          %p182 = pneg %p76
        $region14: #{tpu_custom_call.1} parent=11 // pred_check_branch
          %184 = sbr.rel (%p182) target = $region16
        $region15: #{tpu_custom_call.1} parent=11 // pred_region
          %s186 = ssub.s32 896, 896
          %187 = vsyncadd [#allocation4], %s186
          %s188 = sshll.u32 [#allocation3], 4
          %s189 = int_to_ptr.vmem [resolvable:$true] %s188
          %194 = dma.hbm_to_vmem [thread:$0]  %s1, 896, %s189, [#allocation4], 128, 128, 8
        $region16: #{tpu_custom_call.1} parent=11 // pred_fallthru
          _
        // Predicated region
        $region17: #{tpu_custom_call.1} parent=11 // pred_check
          %p195 = pneg %p97
        $region18: #{tpu_custom_call.1} parent=11 // pred_check_branch
          %197 = sbr.rel (%p195) target = $region20
        $region19: #{tpu_custom_call.1} parent=11 // pred_region
          _
        $region20: #{tpu_custom_call.1} parent=11 // pred_fallthru
          _
        // Predicated region
        $region21: #{tpu_custom_call.1} parent=11 // pred_check
          %p198 = pneg %p118
        $region22: #{tpu_custom_call.1} parent=11 // pred_check_branch
          %200 = sbr.rel (%p198) target = $region24
        $region23: #{tpu_custom_call.1} parent=11 // pred_region
          _
        $region24: #{tpu_custom_call.1} parent=11 // pred_fallthru
          _
        // Predicated region
        $region25: #{tpu_custom_call.1} parent=11 // pred_check
          %p201 = pneg %p139
        $region26: #{tpu_custom_call.1} parent=11 // pred_check_branch
          %203 = sbr.rel (%p201) target = $region28
        $region27: #{tpu_custom_call.1} parent=11 // pred_region
          _
        $region28: #{tpu_custom_call.1} parent=11 // pred_fallthru
          _
      $region12: #{tpu_custom_call.1} parent=5 // pred_fallthru
        _
      %p204 = scmp.lt.s32.totalorder %s15, 2
      // Predicated region
      $region29: #{tpu_custom_call.1} parent=5 // pred_check
        %p205 = pneg %p204
      $region30: #{tpu_custom_call.1} parent=5 // pred_check_branch
        %207 = sbr.rel (%p205) target = $region32
      $region31: #{tpu_custom_call.1} parent=5 // pred_region
        // Predicated region
        $region33: #{tpu_custom_call.1} parent=31 // pred_check
          %p208 = pneg %p49
        $region34: #{tpu_custom_call.1} parent=31 // pred_check_branch
          %210 = sbr.rel (%p208) target = $region36
        $region35: #{tpu_custom_call.1} parent=31 // pred_region
          %p211 = scmp.lt.s32.totalorder %s22, 1
          %s212 = scalar_select %p211, %s22, 1
          %p213 = scmp.lt.s32.totalorder %s23, 0
          %s214 = scalar_select %p213, %s23, 0
          %s215 = sadd.s32 %s214, %s212
          %s216 = smul.addr %s215, 8
          %s217 = scalar_lea.vmem %s0, %s216
        $region36: #{tpu_custom_call.1} parent=31 // pred_fallthru
          _
      $region32: #{tpu_custom_call.1} parent=5 // pred_fallthru
        _
      %p218 = scmp.le.s32.totalorder 1, %s15
      %p219 = scmp.lt.s32.totalorder %s15, 3
      %p220 = pnand %p218, %p219
      %p221 = pneg %p220
      // Predicated region
      $region37: #{tpu_custom_call.1} parent=5 // pred_check
        _
      $region38: #{tpu_custom_call.1} parent=5 // pred_check_branch
        %223 = sbr.rel (%p220) target = $region40
      $region39: #{tpu_custom_call.1} parent=5 // pred_region
        %s224 = ssub.s32 %s15, 1
        // Predicated region
        $region41: #{tpu_custom_call.1} parent=39 // pred_check
          %p225 = pneg %p76
        $region42: #{tpu_custom_call.1} parent=39 // pred_check_branch
          %227 = sbr.rel (%p225) target = $region44
        $region43: #{tpu_custom_call.1} parent=39 // pred_region
          %228 = dma.done [#allocation4], 896
        $region44: #{tpu_custom_call.1} parent=39 // pred_fallthru
          _
        %p229 = scmp.lt.s32.totalorder %s24, 1
        %s230 = scalar_select %p229, %s24, 1
        %p231 = scmp.lt.s32.totalorder %s25, 0
        %s232 = scalar_select %p231, %s25, 0
        %s233 = sadd.s32 %s232, %s230
        %s234 = smul.addr %s233, 8
        %s235 = scalar_lea.vmem %s0, %s234
        %p236 = pneg %p55
        %p237 = pneg %p52
        %p238 = pneg %p76
        %p239 = pneg %p73
        %p240 = pneg %p97
        %p241 = pneg %p94
        %p242 = pneg %p118
        %p243 = pneg %p115
        %p244 = pneg %p139
        %p245 = pneg %p136
        %p246 = pneg %p167
        %p247 = pneg %p164
        %s248 = sand.u32 %s154, 1
        %s249 = scalar_lea.sflag [#allocation5], %s248
        %s250 = sand.u32 %s154, 1
        %s251 = smul.addr %s250, 8
        %s252 = scalar_lea.vmem [#allocation6], %s251
        %p253 = scmp.lt.s32.totalorder %s24, 1
        %s254 = scalar_select %p253, %s24, 1
        %p255 = scmp.lt.s32.totalorder %s25, 0
        %s256 = scalar_select %p255, %s25, 0
        %s257 = sadd.s32 %s256, %s254
        %s258 = smul.addr %s257, 8
        %s259 = scalar_lea.vmem %s0, %s258
        %p260 = scmp.eq.s32.totalorder %s25, 0
        // Predicated region
        $region45: #{tpu_custom_call.1} parent=39 // pred_check
          %p261 = pneg %p260
        $region46: #{tpu_custom_call.1} parent=39 // pred_check_branch
          %263 = sbr.rel (%p261) target = $region48
        $region47: #{tpu_custom_call.1} parent=39 // pred_region
          %264 = vst [vmem:[#allocation2] sm:$0xff] 0.0
        $region48: #{tpu_custom_call.1} parent=39 // pred_fallthru
          _
        %p265 = scmp.gt.s32.totalorder %s25, 0
        // Predicated region
        $region49: #{tpu_custom_call.1} parent=39 // pred_check
          %p266 = pneg %p265
        $region50: #{tpu_custom_call.1} parent=39 // pred_check_branch
          %268 = sbr.rel (%p266) target = $region52
        $region51: #{tpu_custom_call.1} parent=39 // pred_region
          %v269 = vld [vmem:[#allocation2] sm:$0xff]
          %v270 = vld [vmem:[#allocation2 + $0x8] sm:$0xff]
          %273 = vrot.lane.b32.xlu0 %v269, 112
          %v274 = vpop.permute.xlu0 %273
          %275 = vrot.lane.b32.xlu0 %v270, 112
          %v276 = vpop.permute.xlu0 %275
          %vm277 = vcmask 916480
          %v278 = vsel %vm277, %v274, %v276
          %280 = vst [vmem:[#allocation2] sm:$0xff] %v278
        $region52: #{tpu_custom_call.1} parent=39 // pred_fallthru
          _
        %v281 = vld [vmem:[%s259] sm:$0xff]
        %vm282 = vcmask 130048
        %283 = vst.msk [vmem:[#allocation2 + $0x8] sm:$0xff] %vm282, %v281
        %v284 = vld [vmem:[#allocation3] sm:$0xff]
        %v285 = vld [vmem:[#allocation2] sm:$0xff]
        %v286 = vld [vmem:[#allocation2 + $0x8] sm:$0xff]
        %s287 = scalar_lea.vmem [#allocation3], 8
        %v288 = vld [vmem:[%s287] sm:$0xff]
        %291 = vrot.lane.b32.xlu0 %v285, 10
        %v292 = vpop.permute.xlu0 %291
        %293 = vrot.lane.b32.xlu0 %v286, 10
        %v294 = vpop.permute.xlu0 %293
        %vm295 = vcmask 80896
        %v296 = vsel %vm295, %v292, %v294
        %vm298 = vcmask 64512
        %v300 = vsel %vm298, %v288, 0
        %302 = vmatprep.subr.mxu0 0.0
        %303 = vmatpush1.msra.mxu0 %v296
        %304 = vmatprep.subr.mxu0 0.0
        %305 = vmatpush1.msra.mxu0 0.0
        %306 = vmatprep.subr.mxu0 0.0
        %307 = vmatpush1.msra.mxu0 0.0
        %308 = vmatprep.subr.mxu0 0.0
        %309 = vmatpush1.msra.mxu0 0.0
        %310 = vmatprep.subr.mxu0 0.0
        %311 = vmatpush1.msra.mxu0 0.0
        %312 = vmatprep.subr.mxu0 0.0
        %313 = vmatpush1.msra.mxu0 0.0
        %314 = vmatprep.subr.mxu0 0.0
        %315 = vmatpush1.msra.mxu0 0.0
        %316 = vmatprep.subr.mxu0 0.0
        %317 = vmatpush1.msra.mxu0 0.0
        %318 = vmatprep.subr.mxu0 0.0
        %319 = vmatpush1.msra.mxu0 0.0
        %320 = vmatprep.subr.mxu0 0.0
        %321 = vmatpush1.msra.mxu0 0.0
        %322 = vmatprep.subr.mxu0 0.0
        %323 = vmatpush1.msra.mxu0 0.0
        %324 = vmatprep.subr.mxu0 0.0
        %325 = vmatpush1.msra.mxu0 0.0
        %326 = vmatprep.subr.mxu0 0.0
        %327 = vmatpush1.msra.mxu0 0.0
        %328 = vmatprep.subr.mxu0 0.0
        %329 = vmatpush1.msra.mxu0 0.0
        %330 = vmatprep.subr.mxu0 0.0
        %331 = vmatpush1.msra.mxu0 0.0
        %332 = vmatprep.subr.mxu0 0.0
        %333 = vmatpush1.msra.mxu0 0.0
        %334 = vmatprep.subr.mxu0 0.0
        %335 = vmatpush1.msra.mxu0 0.0
        %336 = vmatprep.subr.mxu0 0.0
        %337 = vmatpush1.msra.mxu0 0.0
        %338 = vmatprep.subr.mxu0 0.0
        %339 = vmatpush1.msra.mxu0 0.0
        %340 = vmatprep.subr.mxu0 0.0
        %341 = vmatpush1.msra.mxu0 0.0
        %342 = vmatprep.subr.mxu0 0.0
        %343 = vmatpush1.msra.mxu0 0.0
        %344 = vmatprep.subr.mxu0 0.0
        %345 = vmatpush1.msra.mxu0 0.0
        %346 = vmatprep.subr.mxu0 0.0
        %347 = vmatpush1.msra.mxu0 0.0
        %348 = vmatprep.subr.mxu0 0.0
        %349 = vmatpush1.msra.mxu0 0.0
        %350 = vmatprep.subr.mxu0 0.0
        %351 = vmatpush1.msra.mxu0 0.0
        %352 = vmatprep.subr.mxu0 0.0
        %353 = vmatpush1.msra.mxu0 0.0
        %354 = vmatprep.subr.mxu0 0.0
        %355 = vmatpush1.msra.mxu0 0.0
        %356 = vmatprep.subr.mxu0 0.0
        %357 = vmatpush1.msra.mxu0 0.0
        %358 = vmatprep.subr.mxu0 0.0
        %359 = vmatpush1.msra.mxu0 0.0
        %360 = vmatprep.subr.mxu0 0.0
        %361 = vmatpush1.msra.mxu0 0.0
        %362 = vmatprep.subr.mxu0 0.0
        %363 = vmatpush1.msra.mxu0 0.0
        %364 = vmatprep.subr.mxu0 0.0
        %365 = vmatpush1.msra.mxu0 0.0
        %366 = vmatprep.mubr.f32.mxu0 0.0
        %367 = vmatmul.mubr.f32.gmra.mrb[0].mxu0 %v300
        %v368 = vpop.f32.mrb[0].mxu0
        %v369 = vadd.f32 0.0, %v368
        %v370 = vpop.f32.mrb[0].mxu0
        %371 = vdwg.mxu0
        %372 = vrot.lane.b32.xlu0 %v285, 12
        %v373 = vpop.permute.xlu0 %372
        %374 = vrot.lane.b32.xlu0 %v286, 12
        %v375 = vpop.permute.xlu0 %374
        %vm376 = vcmask 97280
        %v377 = vsel %vm376, %v373, %v375
        %v380 = vsel %vm298, %v284, 0
        %382 = vmatprep.subr.mxu0 0.0
        %383 = vmatpush1.msra.mxu0 %v377
        %384 = vmatprep.subr.mxu0 0.0
        %385 = vmatpush1.msra.mxu0 0.0
        %386 = vmatprep.subr.mxu0 0.0
        %387 = vmatpush1.msra.mxu0 0.0
        %388 = vmatprep.subr.mxu0 0.0
        %389 = vmatpush1.msra.mxu0 0.0
        %390 = vmatprep.subr.mxu0 0.0
        %391 = vmatpush1.msra.mxu0 0.0
        %392 = vmatprep.subr.mxu0 0.0
        %393 = vmatpush1.msra.mxu0 0.0
        %394 = vmatprep.subr.mxu0 0.0
        %395 = vmatpush1.msra.mxu0 0.0
        %396 = vmatprep.subr.mxu0 0.0
        %397 = vmatpush1.msra.mxu0 0.0
        %398 = vmatprep.subr.mxu0 0.0
        %399 = vmatpush1.msra.mxu0 0.0
        %400 = vmatprep.subr.mxu0 0.0
        %401 = vmatpush1.msra.mxu0 0.0
        %402 = vmatprep.subr.mxu0 0.0
        %403 = vmatpush1.msra.mxu0 0.0
        %404 = vmatprep.subr.mxu0 0.0
        %405 = vmatpush1.msra.mxu0 0.0
        %406 = vmatprep.subr.mxu0 0.0
        %407 = vmatpush1.msra.mxu0 0.0
        %408 = vmatprep.subr.mxu0 0.0
        %409 = vmatpush1.msra.mxu0 0.0
        %410 = vmatprep.subr.mxu0 0.0
        %411 = vmatpush1.msra.mxu0 0.0
        %412 = vmatprep.subr.mxu0 0.0
        %413 = vmatpush1.msra.mxu0 0.0
        %414 = vmatprep.subr.mxu0 0.0
        %415 = vmatpush1.msra.mxu0 0.0
        %416 = vmatprep.subr.mxu0 0.0
        %417 = vmatpush1.msra.mxu0 0.0
        %418 = vmatprep.subr.mxu0 0.0
        %419 = vmatpush1.msra.mxu0 0.0
        %420 = vmatprep.subr.mxu0 0.0
        %421 = vmatpush1.msra.mxu0 0.0
        %422 = vmatprep.subr.mxu0 0.0
        %423 = vmatpush1.msra.mxu0 0.0
        %424 = vmatprep.subr.mxu0 0.0
        %425 = vmatpush1.msra.mxu0 0.0
        %426 = vmatprep.subr.mxu0 0.0
        %427 = vmatpush1.msra.mxu0 0.0
        %428 = vmatprep.subr.mxu0 0.0
        %429 = vmatpush1.msra.mxu0 0.0
        %430 = vmatprep.subr.mxu0 0.0
        %431 = vmatpush1.msra.mxu0 0.0
        %432 = vmatprep.subr.mxu0 0.0
        %433 = vmatpush1.msra.mxu0 0.0
        %434 = vmatprep.subr.mxu0 0.0
        %435 = vmatpush1.msra.mxu0 0.0
        %436 = vmatprep.subr.mxu0 0.0
        %437 = vmatpush1.msra.mxu0 0.0
        %438 = vmatprep.subr.mxu0 0.0
        %439 = vmatpush1.msra.mxu0 0.0
        %440 = vmatprep.subr.mxu0 0.0
        %441 = vmatpush1.msra.mxu0 0.0
        %442 = vmatprep.subr.mxu0 0.0
        %443 = vmatpush1.msra.mxu0 0.0
        %444 = vmatprep.subr.mxu0 0.0
        %445 = vmatpush1.msra.mxu0 0.0
        %446 = vmatprep.mubr.f32.mxu0 0.0
        %447 = vmatmul.mubr.f32.gmra.mrb[0].mxu0 %v380
        %v448 = vpop.f32.mrb[0].mxu0
        %v449 = vadd.f32 %v369, %v448
        %v450 = vpop.f32.mrb[0].mxu0
        %451 = vdwg.mxu0
        %s452 = scalar_lea.vmem [#allocation3], 16
        %v453 = vld [vmem:[%s452] sm:$0xff]
        %454 = vrot.lane.b32.xlu0 %v285, 8
        %v455 = vpop.permute.xlu0 %454
        %456 = vrot.lane.b32.xlu0 %v286, 8
        %v457 = vpop.permute.xlu0 %456
        %v458 = vsel %vm298, %v455, %v457
        %v461 = vsel %vm298, %v453, 0
        %463 = vmatprep.subr.mxu0 0.0
        %464 = vmatpush1.msra.mxu0 %v458
        %465 = vmatprep.subr.mxu0 0.0
        %466 = vmatpush1.msra.mxu0 0.0
        %467 = vmatprep.subr.mxu0 0.0
        %468 = vmatpush1.msra.mxu0 0.0
        %469 = vmatprep.subr.mxu0 0.0
        %470 = vmatpush1.msra.mxu0 0.0
        %471 = vmatprep.subr.mxu0 0.0
        %472 = vmatpush1.msra.mxu0 0.0
        %473 = vmatprep.subr.mxu0 0.0
        %474 = vmatpush1.msra.mxu0 0.0
        %475 = vmatprep.subr.mxu0 0.0
        %476 = vmatpush1.msra.mxu0 0.0
        %477 = vmatprep.subr.mxu0 0.0
        %478 = vmatpush1.msra.mxu0 0.0
        %479 = vmatprep.subr.mxu0 0.0
        %480 = vmatpush1.msra.mxu0 0.0
        %481 = vmatprep.subr.mxu0 0.0
        %482 = vmatpush1.msra.mxu0 0.0
        %483 = vmatprep.subr.mxu0 0.0
        %484 = vmatpush1.msra.mxu0 0.0
        %485 = vmatprep.subr.mxu0 0.0
        %486 = vmatpush1.msra.mxu0 0.0
        %487 = vmatprep.subr.mxu0 0.0
        %488 = vmatpush1.msra.mxu0 0.0
        %489 = vmatprep.subr.mxu0 0.0
        %490 = vmatpush1.msra.mxu0 0.0
        %491 = vmatprep.subr.mxu0 0.0
        %492 = vmatpush1.msra.mxu0 0.0
        %493 = vmatprep.subr.mxu0 0.0
        %494 = vmatpush1.msra.mxu0 0.0
        %495 = vmatprep.subr.mxu0 0.0
        %496 = vmatpush1.msra.mxu0 0.0
        %497 = vmatprep.subr.mxu0 0.0
        %498 = vmatpush1.msra.mxu0 0.0
        %499 = vmatprep.subr.mxu0 0.0
        %500 = vmatpush1.msra.mxu0 0.0
        %501 = vmatprep.subr.mxu0 0.0
        %502 = vmatpush1.msra.mxu0 0.0
        %503 = vmatprep.subr.mxu0 0.0
        %504 = vmatpush1.msra.mxu0 0.0
        %505 = vmatprep.subr.mxu0 0.0
        %506 = vmatpush1.msra.mxu0 0.0
        %507 = vmatprep.subr.mxu0 0.0
        %508 = vmatpush1.msra.mxu0 0.0
        %509 = vmatprep.subr.mxu0 0.0
        %510 = vmatpush1.msra.mxu0 0.0
        %511 = vmatprep.subr.mxu0 0.0
        %512 = vmatpush1.msra.mxu0 0.0
        %513 = vmatprep.subr.mxu0 0.0
        %514 = vmatpush1.msra.mxu0 0.0
        %515 = vmatprep.subr.mxu0 0.0
        %516 = vmatpush1.msra.mxu0 0.0
        %517 = vmatprep.subr.mxu0 0.0
        %518 = vmatpush1.msra.mxu0 0.0
        %519 = vmatprep.subr.mxu0 0.0
        %520 = vmatpush1.msra.mxu0 0.0
        %521 = vmatprep.subr.mxu0 0.0
        %522 = vmatpush1.msra.mxu0 0.0
        %523 = vmatprep.subr.mxu0 0.0
        %524 = vmatpush1.msra.mxu0 0.0
        %525 = vmatprep.subr.mxu0 0.0
        %526 = vmatpush1.msra.mxu0 0.0
        %527 = vmatprep.mubr.f32.mxu0 0.0
        %528 = vmatmul.mubr.f32.gmra.mrb[0].mxu0 %v461
        %v529 = vpop.f32.mrb[0].mxu0
        %v530 = vadd.f32 0.0, %v529
        %v531 = vpop.f32.mrb[0].mxu0
        %532 = vdwg.mxu0
        %v533 = vadd.f32 %v449, %v530
        %s534 = scalar_lea.vmem [#allocation3], 24
        %v535 = vld [vmem:[%s534] sm:$0xff]
        %536 = vrot.lane.b32.xlu0 %v285, 6
        %v537 = vpop.permute.xlu0 %536
        %538 = vrot.lane.b32.xlu0 %v286, 6
        %v539 = vpop.permute.xlu0 %538
        %vm540 = vcmask 48128
        %v541 = vsel %vm540, %v537, %v539
        %v544 = vsel %vm298, %v535, 0
        %546 = vmatprep.subr.mxu0 0.0
        %547 = vmatpush1.msra.mxu0 %v541
        %548 = vmatprep.subr.mxu0 0.0
        %549 = vmatpush1.msra.mxu0 0.0
        %550 = vmatprep.subr.mxu0 0.0
        %551 = vmatpush1.msra.mxu0 0.0
        %552 = vmatprep.subr.mxu0 0.0
        %553 = vmatpush1.msra.mxu0 0.0
        %554 = vmatprep.subr.mxu0 0.0
        %555 = vmatpush1.msra.mxu0 0.0
        %556 = vmatprep.subr.mxu0 0.0
        %557 = vmatpush1.msra.mxu0 0.0
        %558 = vmatprep.subr.mxu0 0.0
        %559 = vmatpush1.msra.mxu0 0.0
        %560 = vmatprep.subr.mxu0 0.0
        %561 = vmatpush1.msra.mxu0 0.0
        %562 = vmatprep.subr.mxu0 0.0
        %563 = vmatpush1.msra.mxu0 0.0
        %564 = vmatprep.subr.mxu0 0.0
        %565 = vmatpush1.msra.mxu0 0.0
        %566 = vmatprep.subr.mxu0 0.0
        %567 = vmatpush1.msra.mxu0 0.0
        %568 = vmatprep.subr.mxu0 0.0
        %569 = vmatpush1.msra.mxu0 0.0
        %570 = vmatprep.subr.mxu0 0.0
        %571 = vmatpush1.msra.mxu0 0.0
        %572 = vmatprep.subr.mxu0 0.0
        %573 = vmatpush1.msra.mxu0 0.0
        %574 = vmatprep.subr.mxu0 0.0
        %575 = vmatpush1.msra.mxu0 0.0
        %576 = vmatprep.subr.mxu0 0.0
        %577 = vmatpush1.msra.mxu0 0.0
        %578 = vmatprep.subr.mxu0 0.0
        %579 = vmatpush1.msra.mxu0 0.0
        %580 = vmatprep.subr.mxu0 0.0
        %581 = vmatpush1.msra.mxu0 0.0
        %582 = vmatprep.subr.mxu0 0.0
        %583 = vmatpush1.msra.mxu0 0.0
        %584 = vmatprep.subr.mxu0 0.0
        %585 = vmatpush1.msra.mxu0 0.0
        %586 = vmatprep.subr.mxu0 0.0
        %587 = vmatpush1.msra.mxu0 0.0
        %588 = vmatprep.subr.mxu0 0.0
        %589 = vmatpush1.msra.mxu0 0.0
        %590 = vmatprep.subr.mxu0 0.0
        %591 = vmatpush1.msra.mxu0 0.0
        %592 = vmatprep.subr.mxu0 0.0
        %593 = vmatpush1.msra.mxu0 0.0
        %594 = vmatprep.subr.mxu0 0.0
        %595 = vmatpush1.msra.mxu0 0.0
        %596 = vmatprep.subr.mxu0 0.0
        %597 = vmatpush1.msra.mxu0 0.0
        %598 = vmatprep.subr.mxu0 0.0
        %599 = vmatpush1.msra.mxu0 0.0
        %600 = vmatprep.subr.mxu0 0.0
        %601 = vmatpush1.msra.mxu0 0.0
        %602 = vmatprep.subr.mxu0 0.0
        %603 = vmatpush1.msra.mxu0 0.0
        %604 = vmatprep.subr.mxu0 0.0
        %605 = vmatpush1.msra.mxu0 0.0
        %606 = vmatprep.subr.mxu0 0.0
        %607 = vmatpush1.msra.mxu0 0.0
        %608 = vmatprep.subr.mxu0 0.0
        %609 = vmatpush1.msra.mxu0 0.0
        %610 = vmatprep.mubr.f32.mxu0 0.0
        %611 = vmatmul.mubr.f32.gmra.mrb[0].mxu0 %v544
        %v612 = vpop.f32.mrb[0].mxu0
        %v613 = vadd.f32 0.0, %v612
        %v614 = vpop.f32.mrb[0].mxu0
        %615 = vdwg.mxu0
        %v616 = vadd.f32 %v533, %v613
        %s617 = scalar_lea.vmem [#allocation3], 32
        %v618 = vld [vmem:[%s617] sm:$0xff]
        %619 = vrot.lane.b32.xlu0 %v285, 4
        %v620 = vpop.permute.xlu0 %619
        %621 = vrot.lane.b32.xlu0 %v286, 4
        %v622 = vpop.permute.xlu0 %621
        %vm623 = vcmask 31744
        %v624 = vsel %vm623, %v620, %v622
        %v627 = vsel %vm298, %v618, 0
        %629 = vmatprep.subr.mxu0 0.0
        %630 = vmatpush1.msra.mxu0 %v624
        %631 = vmatprep.subr.mxu0 0.0
        %632 = vmatpush1.msra.mxu0 0.0
        %633 = vmatprep.subr.mxu0 0.0
        %634 = vmatpush1.msra.mxu0 0.0
        %635 = vmatprep.subr.mxu0 0.0
        %636 = vmatpush1.msra.mxu0 0.0
        %637 = vmatprep.subr.mxu0 0.0
        %638 = vmatpush1.msra.mxu0 0.0
        %639 = vmatprep.subr.mxu0 0.0
        %640 = vmatpush1.msra.mxu0 0.0
        %641 = vmatprep.subr.mxu0 0.0
        %642 = vmatpush1.msra.mxu0 0.0
        %643 = vmatprep.subr.mxu0 0.0
        %644 = vmatpush1.msra.mxu0 0.0
        %645 = vmatprep.subr.mxu0 0.0
        %646 = vmatpush1.msra.mxu0 0.0
        %647 = vmatprep.subr.mxu0 0.0
        %648 = vmatpush1.msra.mxu0 0.0
        %649 = vmatprep.subr.mxu0 0.0
        %650 = vmatpush1.msra.mxu0 0.0
        %651 = vmatprep.subr.mxu0 0.0
        %652 = vmatpush1.msra.mxu0 0.0
        %653 = vmatprep.subr.mxu0 0.0
        %654 = vmatpush1.msra.mxu0 0.0
        %655 = vmatprep.subr.mxu0 0.0
        %656 = vmatpush1.msra.mxu0 0.0
        %657 = vmatprep.subr.mxu0 0.0
        %658 = vmatpush1.msra.mxu0 0.0
        %659 = vmatprep.subr.mxu0 0.0
        %660 = vmatpush1.msra.mxu0 0.0
        %661 = vmatprep.subr.mxu0 0.0
        %662 = vmatpush1.msra.mxu0 0.0
        %663 = vmatprep.subr.mxu0 0.0
        %664 = vmatpush1.msra.mxu0 0.0
        %665 = vmatprep.subr.mxu0 0.0
        %666 = vmatpush1.msra.mxu0 0.0
        %667 = vmatprep.subr.mxu0 0.0
        %668 = vmatpush1.msra.mxu0 0.0
        %669 = vmatprep.subr.mxu0 0.0
        %670 = vmatpush1.msra.mxu0 0.0
        %671 = vmatprep.subr.mxu0 0.0
        %672 = vmatpush1.msra.mxu0 0.0
        %673 = vmatprep.subr.mxu0 0.0
        %674 = vmatpush1.msra.mxu0 0.0
        %675 = vmatprep.subr.mxu0 0.0
        %676 = vmatpush1.msra.mxu0 0.0
        %677 = vmatprep.subr.mxu0 0.0
        %678 = vmatpush1.msra.mxu0 0.0
        %679 = vmatprep.subr.mxu0 0.0
        %680 = vmatpush1.msra.mxu0 0.0
        %681 = vmatprep.subr.mxu0 0.0
        %682 = vmatpush1.msra.mxu0 0.0
        %683 = vmatprep.subr.mxu0 0.0
        %684 = vmatpush1.msra.mxu0 0.0
        %685 = vmatprep.subr.mxu0 0.0
        %686 = vmatpush1.msra.mxu0 0.0
        %687 = vmatprep.subr.mxu0 0.0
        %688 = vmatpush1.msra.mxu0 0.0
        %689 = vmatprep.subr.mxu0 0.0
        %690 = vmatpush1.msra.mxu0 0.0
        %691 = vmatprep.subr.mxu0 0.0
        %692 = vmatpush1.msra.mxu0 0.0
        %693 = vmatprep.mubr.f32.mxu0 0.0
        %694 = vmatmul.mubr.f32.gmra.mrb[0].mxu0 %v627
        %v695 = vpop.f32.mrb[0].mxu0
        %v696 = vadd.f32 0.0, %v695
        %v697 = vpop.f32.mrb[0].mxu0
        %698 = vdwg.mxu0
        %v699 = vadd.f32 %v616, %v696
        %s700 = scalar_lea.vmem [#allocation3], 40
        %v701 = vld [vmem:[%s700] sm:$0xff]
        %702 = vrot.lane.b32.xlu0 %v285, 2
        %v703 = vpop.permute.xlu0 %702
        %704 = vrot.lane.b32.xlu0 %v286, 2
        %v705 = vpop.permute.xlu0 %704
        %vm706 = vcmask 15360
        %v707 = vsel %vm706, %v703, %v705
        %v710 = vsel %vm298, %v701, 0
        %712 = vmatprep.subr.mxu0 0.0
        %713 = vmatpush1.msra.mxu0 %v707
        %714 = vmatprep.subr.mxu0 0.0
        %715 = vmatpush1.msra.mxu0 0.0
        %716 = vmatprep.subr.mxu0 0.0
        %717 = vmatpush1.msra.mxu0 0.0
        %718 = vmatprep.subr.mxu0 0.0
        %719 = vmatpush1.msra.mxu0 0.0
        %720 = vmatprep.subr.mxu0 0.0
        %721 = vmatpush1.msra.mxu0 0.0
        %722 = vmatprep.subr.mxu0 0.0
        %723 = vmatpush1.msra.mxu0 0.0
        %724 = vmatprep.subr.mxu0 0.0
        %725 = vmatpush1.msra.mxu0 0.0
        %726 = vmatprep.subr.mxu0 0.0
        %727 = vmatpush1.msra.mxu0 0.0
        %728 = vmatprep.subr.mxu0 0.0
        %729 = vmatpush1.msra.mxu0 0.0
        %730 = vmatprep.subr.mxu0 0.0
        %731 = vmatpush1.msra.mxu0 0.0
        %732 = vmatprep.subr.mxu0 0.0
        %733 = vmatpush1.msra.mxu0 0.0
        %734 = vmatprep.subr.mxu0 0.0
        %735 = vmatpush1.msra.mxu0 0.0
        %736 = vmatprep.subr.mxu0 0.0
        %737 = vmatpush1.msra.mxu0 0.0
        %738 = vmatprep.subr.mxu0 0.0
        %739 = vmatpush1.msra.mxu0 0.0
        %740 = vmatprep.subr.mxu0 0.0
        %741 = vmatpush1.msra.mxu0 0.0
        %742 = vmatprep.subr.mxu0 0.0
        %743 = vmatpush1.msra.mxu0 0.0
        %744 = vmatprep.subr.mxu0 0.0
        %745 = vmatpush1.msra.mxu0 0.0
        %746 = vmatprep.subr.mxu0 0.0
        %747 = vmatpush1.msra.mxu0 0.0
        %748 = vmatprep.subr.mxu0 0.0
        %749 = vmatpush1.msra.mxu0 0.0
        %750 = vmatprep.subr.mxu0 0.0
        %751 = vmatpush1.msra.mxu0 0.0
        %752 = vmatprep.subr.mxu0 0.0
        %753 = vmatpush1.msra.mxu0 0.0
        %754 = vmatprep.subr.mxu0 0.0
        %755 = vmatpush1.msra.mxu0 0.0
        %756 = vmatprep.subr.mxu0 0.0
        %757 = vmatpush1.msra.mxu0 0.0
        %758 = vmatprep.subr.mxu0 0.0
        %759 = vmatpush1.msra.mxu0 0.0
        %760 = vmatprep.subr.mxu0 0.0
        %761 = vmatpush1.msra.mxu0 0.0
        %762 = vmatprep.subr.mxu0 0.0
        %763 = vmatpush1.msra.mxu0 0.0
        %764 = vmatprep.subr.mxu0 0.0
        %765 = vmatpush1.msra.mxu0 0.0
        %766 = vmatprep.subr.mxu0 0.0
        %767 = vmatpush1.msra.mxu0 0.0
        %768 = vmatprep.subr.mxu0 0.0
        %769 = vmatpush1.msra.mxu0 0.0
        %770 = vmatprep.subr.mxu0 0.0
        %771 = vmatpush1.msra.mxu0 0.0
        %772 = vmatprep.subr.mxu0 0.0
        %773 = vmatpush1.msra.mxu0 0.0
        %774 = vmatprep.subr.mxu0 0.0
        %775 = vmatpush1.msra.mxu0 0.0
        %776 = vmatprep.mubr.f32.mxu0 0.0
        %777 = vmatmul.mubr.f32.gmra.mrb[0].mxu0 %v710
        %v778 = vpop.f32.mrb[0].mxu0
        %v779 = vadd.f32 0.0, %v778
        %v780 = vpop.f32.mrb[0].mxu0
        %781 = vdwg.mxu0
        %v782 = vadd.f32 %v699, %v779
        %s783 = scalar_lea.vmem [#allocation3], 48
        %v784 = vld [vmem:[%s783] sm:$0xff]
        %v786 = vsel %vm298, %v784, 0
        %788 = vmatprep.subr.mxu0 0.0
        %789 = vmatpush1.msra.mxu0 %v286
        %790 = vmatprep.subr.mxu0 0.0
        %791 = vmatpush1.msra.mxu0 0.0
        %792 = vmatprep.subr.mxu0 0.0
        %793 = vmatpush1.msra.mxu0 0.0
        %794 = vmatprep.subr.mxu0 0.0
        %795 = vmatpush1.msra.mxu0 0.0
        %796 = vmatprep.subr.mxu0 0.0
        %797 = vmatpush1.msra.mxu0 0.0
        %798 = vmatprep.subr.mxu0 0.0
        %799 = vmatpush1.msra.mxu0 0.0
        %800 = vmatprep.subr.mxu0 0.0
        %801 = vmatpush1.msra.mxu0 0.0
        %802 = vmatprep.subr.mxu0 0.0
        %803 = vmatpush1.msra.mxu0 0.0
        %804 = vmatprep.subr.mxu0 0.0
        %805 = vmatpush1.msra.mxu0 0.0
        %806 = vmatprep.subr.mxu0 0.0
        %807 = vmatpush1.msra.mxu0 0.0
        %808 = vmatprep.subr.mxu0 0.0
        %809 = vmatpush1.msra.mxu0 0.0
        %810 = vmatprep.subr.mxu0 0.0
        %811 = vmatpush1.msra.mxu0 0.0
        %812 = vmatprep.subr.mxu0 0.0
        %813 = vmatpush1.msra.mxu0 0.0
        %814 = vmatprep.subr.mxu0 0.0
        %815 = vmatpush1.msra.mxu0 0.0
        %816 = vmatprep.subr.mxu0 0.0
        %817 = vmatpush1.msra.mxu0 0.0
        %818 = vmatprep.subr.mxu0 0.0
        %819 = vmatpush1.msra.mxu0 0.0
        %820 = vmatprep.subr.mxu0 0.0
        %821 = vmatpush1.msra.mxu0 0.0
        %822 = vmatprep.subr.mxu0 0.0
        %823 = vmatpush1.msra.mxu0 0.0
        %824 = vmatprep.subr.mxu0 0.0
        %825 = vmatpush1.msra.mxu0 0.0
        %826 = vmatprep.subr.mxu0 0.0
        %827 = vmatpush1.msra.mxu0 0.0
        %828 = vmatprep.subr.mxu0 0.0
        %829 = vmatpush1.msra.mxu0 0.0
        %830 = vmatprep.subr.mxu0 0.0
        %831 = vmatpush1.msra.mxu0 0.0
        %832 = vmatprep.subr.mxu0 0.0
        %833 = vmatpush1.msra.mxu0 0.0
        %834 = vmatprep.subr.mxu0 0.0
        %835 = vmatpush1.msra.mxu0 0.0
        %836 = vmatprep.subr.mxu0 0.0
        %837 = vmatpush1.msra.mxu0 0.0
        %838 = vmatprep.subr.mxu0 0.0
        %839 = vmatpush1.msra.mxu0 0.0
        %840 = vmatprep.subr.mxu0 0.0
        %841 = vmatpush1.msra.mxu0 0.0
        %842 = vmatprep.subr.mxu0 0.0
        %843 = vmatpush1.msra.mxu0 0.0
        %844 = vmatprep.subr.mxu0 0.0
        %845 = vmatpush1.msra.mxu0 0.0
        %846 = vmatprep.subr.mxu0 0.0
        %847 = vmatpush1.msra.mxu0 0.0
        %848 = vmatprep.subr.mxu0 0.0
        %849 = vmatpush1.msra.mxu0 0.0
        %850 = vmatprep.subr.mxu0 0.0
        %851 = vmatpush1.msra.mxu0 0.0
        %852 = vmatprep.mubr.f32.mxu0 0.0
        %853 = vmatmul.mubr.f32.gmra.mrb[0].mxu0 %v786
        %v854 = vpop.f32.mrb[0].mxu0
        %v855 = vadd.f32 0.0, %v854
        %v856 = vpop.f32.mrb[0].mxu0
        %857 = vdwg.mxu0
        %v858 = vadd.f32 %v782, %v855
        %v859 = vld [vmem:[%s2] sm:$0xff]
        %861 = vset.pattern.permute.xlu0 0
        %862 = vperm.xlu0 %861, %v859
        %v863 = vpop.permute.xlu0 %862
        %v865 = vadd.f32 %v858, %v863
        %vm866 = vcmp.gt.f32.partialorder %v865, 0.0
        %v867 = vmin.f32 %v865, 0.0
        %v868 = vmul.f32 %v867, 1.442695
        %v869 = vpow.pop %v868
        %v870 = vsub.f32 %v869, 1.0
        %v871 = vsel %vm866, %v865, %v870
        %v872 = vld [vmem:[%s3] sm:$0xff]
        %v873 = vld [vmem:[%s4] sm:$0xff]
        %875 = vset.pattern.permute.xlu0 0
        %876 = vperm.xlu0 %875, %v873
        %v877 = vpop.permute.xlu0 %876
        %v880 = vsel %vm298, %v872, 0
        %882 = vmatprep.subr.mxu0 0.0
        %883 = vmatpush1.msra.mxu0 %v871
        %884 = vmatprep.subr.mxu0 0.0
        %885 = vmatpush1.msra.mxu0 0.0
        %886 = vmatprep.subr.mxu0 0.0
        %887 = vmatpush1.msra.mxu0 0.0
        %888 = vmatprep.subr.mxu0 0.0
        %889 = vmatpush1.msra.mxu0 0.0
        %890 = vmatprep.subr.mxu0 0.0
        %891 = vmatpush1.msra.mxu0 0.0
        %892 = vmatprep.subr.mxu0 0.0
        %893 = vmatpush1.msra.mxu0 0.0
        %894 = vmatprep.subr.mxu0 0.0
        %895 = vmatpush1.msra.mxu0 0.0
        %896 = vmatprep.subr.mxu0 0.0
        %897 = vmatpush1.msra.mxu0 0.0
        %898 = vmatprep.subr.mxu0 0.0
        %899 = vmatpush1.msra.mxu0 0.0
        %900 = vmatprep.subr.mxu0 0.0
        %901 = vmatpush1.msra.mxu0 0.0
        %902 = vmatprep.subr.mxu0 0.0
        %903 = vmatpush1.msra.mxu0 0.0
        %904 = vmatprep.subr.mxu0 0.0
        %905 = vmatpush1.msra.mxu0 0.0
        %906 = vmatprep.subr.mxu0 0.0
        %907 = vmatpush1.msra.mxu0 0.0
        %908 = vmatprep.subr.mxu0 0.0
        %909 = vmatpush1.msra.mxu0 0.0
        %910 = vmatprep.subr.mxu0 0.0
        %911 = vmatpush1.msra.mxu0 0.0
        %912 = vmatprep.subr.mxu0 0.0
        %913 = vmatpush1.msra.mxu0 0.0
        %914 = vmatprep.subr.mxu0 0.0
        %915 = vmatpush1.msra.mxu0 0.0
        %916 = vmatprep.subr.mxu0 0.0
        %917 = vmatpush1.msra.mxu0 0.0
        %918 = vmatprep.subr.mxu0 0.0
        %919 = vmatpush1.msra.mxu0 0.0
        %920 = vmatprep.subr.mxu0 0.0
        %921 = vmatpush1.msra.mxu0 0.0
        %922 = vmatprep.subr.mxu0 0.0
        %923 = vmatpush1.msra.mxu0 0.0
        %924 = vmatprep.subr.mxu0 0.0
        %925 = vmatpush1.msra.mxu0 0.0
        %926 = vmatprep.subr.mxu0 0.0
        %927 = vmatpush1.msra.mxu0 0.0
        %928 = vmatprep.subr.mxu0 0.0
        %929 = vmatpush1.msra.mxu0 0.0
        %930 = vmatprep.subr.mxu0 0.0
        %931 = vmatpush1.msra.mxu0 0.0
        %932 = vmatprep.subr.mxu0 0.0
        %933 = vmatpush1.msra.mxu0 0.0
        %934 = vmatprep.subr.mxu0 0.0
        %935 = vmatpush1.msra.mxu0 0.0
        %936 = vmatprep.subr.mxu0 0.0
        %937 = vmatpush1.msra.mxu0 0.0
        %938 = vmatprep.subr.mxu0 0.0
        %939 = vmatpush1.msra.mxu0 0.0
        %940 = vmatprep.subr.mxu0 0.0
        %941 = vmatpush1.msra.mxu0 0.0
        %942 = vmatprep.subr.mxu0 0.0
        %943 = vmatpush1.msra.mxu0 0.0
        %944 = vmatprep.subr.mxu0 0.0
        %945 = vmatpush1.msra.mxu0 0.0
        %946 = vmatprep.mubr.f32.mxu0 0.0
        %947 = vmatmul.mubr.f32.gmra.mrb[0].mxu0 %v880
        %v948 = vpop.f32.mrb[0].mxu0
        %v949 = vadd.f32 %v877, %v948
        %v950 = vpop.f32.mrb[0].mxu0
        %951 = vdwg.mxu0
        %v952 = vadd.f32 %v281, %v949
        %953 = vst.msk [vmem:[%s252] sm:$0xff] %vm282, %v952
        %s954 = sand.u32 %s154, 1
        %s955 = scalar_lea.sflag [#allocation5], %s954
        %s956 = sand.u32 %s154, 1
        %s957 = smul.addr %s956, 8
        %s958 = scalar_lea.vmem [#allocation6], %s957
        // Predicated region
        $region53: #{tpu_custom_call.1} parent=39 // pred_check
          %p959 = pneg %p164
        $region54: #{tpu_custom_call.1} parent=39 // pred_check_branch
          %961 = sbr.rel (%p959) target = $region56
        $region55: #{tpu_custom_call.1} parent=39 // pred_region
          %s963 = ssub.s32 128, 128
          %964 = vsyncadd %s955, %s963
          %s965 = sadd.s32 %s25, %s24
          %s966 = smul.addr %s965, 128
          %s967 = scalar_lea.hbm %s5, %s966
          %s969 = sshll.u32 %s958, 4
          %s970 = int_to_ptr.vmem [resolvable:$true] %s969
          %972 = dma.vmem_to_hbm [thread:$0]  %s970, 128, %s967, %s955
        $region56: #{tpu_custom_call.1} parent=39 // pred_fallthru
          _
      $region40: #{tpu_custom_call.1} parent=5 // pred_fallthru
        _
      %p973 = scmp.le.s32.totalorder 2, %s15
      // Predicated region
      $region57: #{tpu_custom_call.1} parent=5 // pred_check
        %p974 = pneg %p973
      $region58: #{tpu_custom_call.1} parent=5 // pred_check_branch
        %976 = sbr.rel (%p974) target = $region60
      $region59: #{tpu_custom_call.1} parent=5 // pred_region
        %s977 = ssub.s32 %s15, 2
        // Predicated region
        $region61: #{tpu_custom_call.1} parent=59 // pred_check
          %p978 = pneg %p170
        $region62: #{tpu_custom_call.1} parent=59 // pred_check_branch
          %980 = sbr.rel (%p978) target = $region64
        $region63: #{tpu_custom_call.1} parent=59 // pred_region
          %s981 = sand.u32 %s155, 1
          %s982 = scalar_lea.sflag [#allocation5], %s981
          %s983 = sand.u32 %s155, 1
          %s984 = smul.addr %s983, 8
          %s985 = scalar_lea.vmem [#allocation6], %s984
          %986 = dma.done %s982, 128
        $region64: #{tpu_custom_call.1} parent=59 // pred_fallthru
          _
      $region60: #{tpu_custom_call.1} parent=5 // pred_fallthru
        _
    $region6: #{tpu_custom_call.1} parent=1 // loop_footer
      %s19 = sadd.s32 1, %s15
    $region7: #{tpu_custom_call.1} parent=1 // loop_footer_branch
      %14 = sbr.rel target = $region3
    $region8: #{tpu_custom_call.1} parent=1 // loop_exit
      _
    %987 = vsyncpa [#allocation4], 1
    %s988 = scalar_lea.sflag [#allocation4], 1
    %989 = vsyncpa %s988, 1
    %990 = vsyncpa [#allocation5], 1
    %s991 = scalar_lea.sflag [#allocation5], 1
    %992 = vsyncpa %s991, 1

</llo_original>
